<compile_context>
chip_gen: v7x
topology: tpu7x:2x2x1
jax: 0.10.0
libtpu: 0.0.40
codegen_flags: <defaults>
</compile_context>

<pallas_src>
import math

import jax
import jax.numpy as jnp
import numpy as np
from jax.experimental import pallas as pl
from jax.experimental.pallas import tpu as pltpu


def _round_up(x, m):
    return ((x + m - 1) // m) * m


def _pick_tile(dim, candidates):
    """Largest candidate that evenly divides dim (candidates sorted desc)."""
    for c in candidates:
        if dim % c == 0:
            return c
    return dim


def rgcn_matmul_kernel(b_ref, y_ref, o_ref):
    """o[i,j] (resident across k) += B[i,k] @ Y[k,j]; relu on the last k step."""
    k = pl.program_id(2)

    @pl.when(k == 0)
    def _init():
        o_ref[...] = jnp.zeros_like(o_ref)

    # bf16 x bf16 -> f32 accumulation straight into the resident output block.
    o_ref[...] += jnp.dot(b_ref[...], y_ref[...],
                          preferred_element_type=jnp.float32)

    @pl.when(k == pl.num_programs(2) - 1)
    def _finalize():
        o_ref[...] = jnp.maximum(o_ref[...], 0.0)


def simple_rgcn_forward(nodes, indices, values, weights):
    """
    nodes:   (n, hfr) float32
    indices: (2, nnz) int32  -- rows in [0, n*r), cols in [0, n)
    values:  (nnz,)   float32
    weights: (r, hfr, hto) float32  (hfr == hto)
    returns: (n, hfr) float32
    """
    n, h = nodes.shape
    r = weights.shape[0]

    # ---- glue (outside the kernel): reassociate + densify -------------------
    # Y[r*n + j, i] = (X @ W_r^T)[j, i] = sum_k X[j,k] W[r,i,k]
    y = jnp.einsum("rik,jk->rji", weights, nodes).reshape(r * n, h)
    # B[i, r*n + j] = A_r[i, j]: permuted densification of the sparse (r*n, n)
    # adjacency (duplicate indices accumulate, matching util.spmm).
    rows_b = indices[0] % n
    cols_b = (indices[0] // n) * n + indices[1]
    b = jnp.zeros((n, r * n), jnp.float32).at[rows_b, cols_b].add(values)

    # ---- pad to lane/sublane friendly shapes, cast MXU inputs to bf16 -------
    n_pad = _round_up(n, 8)
    h_pad = _round_up(h, 128)
    k_dim = r * n
    k_pad = _round_up(k_dim, 128)
    b = jnp.pad(b, ((0, n_pad - n), (0, k_pad - k_dim))).astype(jnp.bfloat16)
    y = jnp.pad(y, ((0, k_pad - k_dim), (0, h_pad - h))).astype(jnp.bfloat16)

    # Tile sizes: capped so double-buffered inputs + resident output stay
    # comfortably inside v7x's 64 MiB VMEM (<~3 MiB here), while v5e/v6e can
    # still use the larger candidates when the padded dims allow it.
    tm = _pick_tile(n_pad, (256, 128, 64, 32, 16, 8))
    tn = _pick_tile(h_pad, (512, 256, 128))
    tk = _pick_tile(k_pad, (512, 256, 128))
    grid = (n_pad // tm, h_pad // tn, k_pad // tk)

    cost = pl.CostEstimate(
        flops=2 * n_pad * k_pad * h_pad,
        transcendentals=0,
        bytes_accessed=b.size * 2 + y.size * 2 + n_pad * h_pad * 4,
    )

    out = pl.pallas_call(
        rgcn_matmul_kernel,
        out_shape=jax.ShapeDtypeStruct((n_pad, h_pad), jnp.float32),
        grid_spec=pltpu.PrefetchScalarGridSpec(
            num_scalar_prefetch=0,
            grid=grid,
            in_specs=[
                pl.BlockSpec((tm, tk), lambda i, j, k: (i, k)),
                pl.BlockSpec((tk, tn), lambda i, j, k: (k, j)),
            ],
            out_specs=pl.BlockSpec((tm, tn), lambda i, j, k: (i, j)),
        ),
        compiler_params=pltpu.CompilerParams(
            dimension_semantics=("parallel", "parallel", "arbitrary")),
        cost_estimate=cost,
    )(b, y)

    return out[:n, :h]


def _reference(nodes, indices, values, weights):
    n, h = nodes.shape
    r = weights.shape[0]
    adj = jnp.zeros((r * n, n), jnp.float32).at[indices[0], indices[1]].add(values)
    msgs = (adj @ nodes).reshape(r, n, h)
    out = jnp.einsum("rij,rnj->nri", weights, msgs).sum(axis=1)
    return jax.nn.relu(out)


if __name__ == "__main__":
    # Small shapes implied by the module: n nodes, r relations, hfr == hto hidden.
    n, r, h, nnz = 16, 4, 32, 64

    key = jax.random.PRNGKey(0)
    k_nodes, k_rows, k_cols, k_vals, k_w = jax.random.split(key, 5)

    nodes = jax.random.normal(k_nodes, (n, h), dtype=jnp.float32)

    # Deterministic synthetic sparse adjacency over the (r*n, n) stacked graph.
    rows = jax.random.randint(k_rows, (nnz,), 0, r * n, dtype=jnp.int32)
    cols = jax.random.randint(k_cols, (nnz,), 0, n, dtype=jnp.int32)
    indices = jnp.stack([rows, cols], axis=0)
    values = jax.random.uniform(k_vals, (nnz,), dtype=jnp.float32)

    # weights: (r, hfr, hto), xavier_uniform with gain = calculate_gain('relu') = sqrt(2)
    fan_in, fan_out = h * h, r * h
    bound = math.sqrt(2.0) * math.sqrt(6.0 / (fan_in + fan_out))
    weights = jax.random.uniform(k_w, (r, h, h), jnp.float32, -bound, bound)

    out = simple_rgcn_forward(nodes, indices, values, weights)
    out = jax.block_until_ready(out)

    ref = _reference(nodes, indices, values, weights)
    # bf16 MXU inputs with f32 accumulation -> loosened tolerance vs pure f32.
    np.testing.assert_allclose(np.asarray(out), np.asarray(ref), rtol=2e-2, atol=2e-2)

    print("KERNEL_OK")
</pallas_src>

<mosaic_0001>
module attributes {stable_mosaic.version = 11 : i64} {
  func.func @rgcn_matmul_kernel(%arg0: i32, %arg1: i32, %arg2: i32, %arg3: memref<16x128xbf16, #tpu.memory_space<vmem>>, %arg4: memref<128x128xbf16, #tpu.memory_space<vmem>>, %arg5: memref<16x128xf32, #tpu.memory_space<vmem>>) attributes {dimension_semantics = [#tpu.dimension_semantics<parallel>, #tpu.dimension_semantics<parallel>, #tpu.dimension_semantics<arbitrary>], iteration_bounds = array<i64: 1, 1, 1>, scalar_prefetch = 0 : i64, scratch_operands = 0 : i64, tpu.core_type = #tpu.core_type<tc>, window_params = [{transform_indices = @transform_0, window_bounds = array<i64: 16, 128>}, {transform_indices = @transform_1, window_bounds = array<i64: 128, 128>}, {transform_indices = @transform_2, window_bounds = array<i64: 16, 128>}]} {
    %c0_i32 = arith.constant 0 : i32
    %0 = arith.cmpi eq, %arg2, %c0_i32 : i32
    %1 = arith.extui %0 : i1 to i32
    %c0_i32_0 = arith.constant 0 : i32
    %2 = arith.cmpi ne, %1, %c0_i32_0 : i32
    scf.if %2 {
      %cst_10 = arith.constant 0.000000e+00 : f32
      %12 = vector.broadcast %cst_10 : f32 to vector<16x128xf32>
      %c0_11 = arith.constant 0 : index
      %c0_12 = arith.constant 0 : index
      %13 = vector.load %arg5[%c0_11, %c0_12] : memref<16x128xf32, #tpu.memory_space<vmem>>, vector<16x128xf32>
      tpu.vector_store %arg5[%c0_11, %c0_12], %12 {strides = array<i32>} : memref<16x128xf32, #tpu.memory_space<vmem>>, vector<16x128xf32>,
    } else {
    }
    %c0 = arith.constant 0 : index
    %c0_1 = arith.constant 0 : index
    %3 = vector.load %arg5[%c0, %c0_1] : memref<16x128xf32, #tpu.memory_space<vmem>>, vector<16x128xf32>
    %c0_2 = arith.constant 0 : index
    %c0_3 = arith.constant 0 : index
    %4 = vector.load %arg3[%c0_2, %c0_3] : memref<16x128xbf16, #tpu.memory_space<vmem>>, vector<16x128xbf16>
    %c0_4 = arith.constant 0 : index
    %c0_5 = arith.constant 0 : index
    %5 = vector.load %arg4[%c0_4, %c0_5] : memref<128x128xbf16, #tpu.memory_space<vmem>>, vector<128x128xbf16>
    %cst = arith.constant dense<0.000000e+00> : vector<16x128xf32>
    %6 = tpu.matmul %4, %5, %cst {dimension_numbers = #tpu.dot_dimension_numbers<[1], [0], [0], [1], [0, 0, 1, 1], [], []>} : vector<16x128xbf16>, vector<128x128xbf16>, vector<16x128xf32> -> vector<16x128xf32>
    %7 = arith.addf %3, %6 : vector<16x128xf32>
    %c0_6 = arith.constant 0 : index
    %c0_7 = arith.constant 0 : index
    %8 = vector.load %arg5[%c0_6, %c0_7] : memref<16x128xf32, #tpu.memory_space<vmem>>, vector<16x128xf32>
    tpu.vector_store %arg5[%c0_6, %c0_7], %7 {strides = array<i32>} : memref<16x128xf32, #tpu.memory_space<vmem>>, vector<16x128xf32>,
    %c0_i32_8 = arith.constant 0 : i32
    %9 = arith.cmpi eq, %arg2, %c0_i32_8 : i32
    %10 = arith.extui %9 : i1 to i32
    %c0_i32_9 = arith.constant 0 : i32
    %11 = arith.cmpi ne, %10, %c0_i32_9 : i32
    scf.if %11 {
      %c0_10 = arith.constant 0 : index
      %c0_11 = arith.constant 0 : index
      %12 = vector.load %arg5[%c0_10, %c0_11] : memref<16x128xf32, #tpu.memory_space<vmem>>, vector<16x128xf32>
      %cst_12 = arith.constant 0.000000e+00 : f32
      %13 = vector.broadcast %cst_12 : f32 to vector<16x128xf32>
      %14 = arith.maximumf %12, %13 : vector<16x128xf32>
      %c0_13 = arith.constant 0 : index
      %c0_14 = arith.constant 0 : index
      %15 = vector.load %arg5[%c0_13, %c0_14] : memref<16x128xf32, #tpu.memory_space<vmem>>, vector<16x128xf32>
      tpu.vector_store %arg5[%c0_13, %c0_14], %14 {strides = array<i32>} : memref<16x128xf32, #tpu.memory_space<vmem>>, vector<16x128xf32>,
    } else {
    }
    return
  }
  func.func @transform_0(%arg0: i32, %arg1: i32, %arg2: i32) -> (i32, i32) {
    %c0_i32 = arith.constant 0 : i32
    return %arg0, %arg2 : i32, i32
  }
  func.func @transform_1(%arg0: i32, %arg1: i32, %arg2: i32) -> (i32, i32) {
    %c0_i32 = arith.constant 0 : i32
    return %arg2, %arg1 : i32, i32
  }
  func.func @transform_2(%arg0: i32, %arg1: i32, %arg2: i32) -> (i32, i32) {
    %c0_i32 = arith.constant 0 : i32
    return %arg0, %arg1 : i32, i32
  }
}

</mosaic_0001>

<llo_original>
// kernel: tpu_custom_call.1
$region0: #{tpu_custom_call.1}
  #allocation0 [shape = 'u32[]', space=smem, size = 0x4, offset = 0x4, fixed_abs, tag = 'smem constant byte address 0x4 - core index']
  #allocation1 [shape = 'u32[144,128]{1,0:T(1,128)}', space=vmem, size = 0x12000, scoped, tag = 'internal scratch']
  %s0 = inlined_call_operand.hbm [shape: bf16[16,128], index: 0, kind: input, shape index: {}]
  %s1 = inlined_call_operand.hbm [shape: bf16[128,128], index: 1, kind: input, shape index: {}]
  %s2 = inlined_call_operand.hbm [shape: f32[16,128], index: 2, kind: output, shape index: {}]
  %s3 = sld [smem:[#allocation0]]
  $region34: #{tpu_custom_call.1} parent=0
    _
  %s5 = ssub.s32 1, %s3
  %s6 = scalar_select 0, %s5, %s3
  $region1: #{tpu_custom_call.1} parent=0
    #allocation2 [shape = 'u8[4096]{0}', space=vmem, size = 0x1000, scoped, tag = 'input window, operand 0, single buffered']
    #allocation3 [shape = 's32[1]{0}', space=sflag, size = 0x4, scoped, tag = 'scoped memory for tpu_custom_call.1']
    #allocation4 [shape = 's32[1]{0}', space=sflag, size = 0x4, scoped, tag = 'scoped memory for tpu_custom_call.1']
    #allocation5 [shape = 'u8[32768]{0}', space=vmem, size = 0x8000, scoped, tag = 'input window, operand 1, single buffered']
    #allocation6 [shape = 's32[1]{0}', space=sflag, size = 0x4, scoped, tag = 'scoped memory for tpu_custom_call.1']
    #allocation7 [shape = 'u8[8192]{0}', space=vmem, size = 0x2000, scoped, tag = 'output window, operand 0, single buffered']
    %7 = vsyncpa [#allocation3], 0
    %8 = vsyncpa [#allocation6], 0
    %9 = vsyncpa [#allocation4], 0
    // Predicated region
    $region2: #{tpu_custom_call.1} parent=1 // pred_check
      _
    $region3: #{tpu_custom_call.1} parent=1 // pred_check_branch
      %11 = sbr.rel (0) target = $region5
    $region4: #{tpu_custom_call.1} parent=1 // pred_region
      %s13 = ssub.s32 128, 128
      %14 = vsyncadd [#allocation3], %s13
      %s15 = sshll.u32 [#allocation2], 4
      %s16 = int_to_ptr.vmem [resolvable:$true] %s15
      %21 = dma.hbm_to_vmem [thread:$0]  %s0, 128, %s16, [#allocation3], 64, 64, 4
    $region5: #{tpu_custom_call.1} parent=1 // pred_fallthru
      _
    // Predicated region
    $region6: #{tpu_custom_call.1} parent=1 // pred_check
      _
    $region7: #{tpu_custom_call.1} parent=1 // pred_check_branch
      %23 = sbr.rel (0) target = $region9
    $region8: #{tpu_custom_call.1} parent=1 // pred_region
      %s25 = ssub.s32 1024, 1024
      %26 = vsyncadd [#allocation6], %s25
      %s27 = sshll.u32 [#allocation5], 4
      %s28 = int_to_ptr.vmem [resolvable:$true] %s27
      %33 = dma.hbm_to_vmem [thread:$0]  %s1, 1024, %s28, [#allocation6], 64, 64, 4
    $region9: #{tpu_custom_call.1} parent=1 // pred_fallthru
      _
    // Predicated region
    $region10: #{tpu_custom_call.1} parent=1 // pred_check
      _
    $region11: #{tpu_custom_call.1} parent=1 // pred_check_branch
      %35 = sbr.rel (0) target = $region13
    $region12: #{tpu_custom_call.1} parent=1 // pred_region
      %36 = dma.done [#allocation3], 128
    $region13: #{tpu_custom_call.1} parent=1 // pred_fallthru
      _
    // Predicated region
    $region14: #{tpu_custom_call.1} parent=1 // pred_check
      _
    $region15: #{tpu_custom_call.1} parent=1 // pred_check_branch
      %38 = sbr.rel (0) target = $region17
    $region16: #{tpu_custom_call.1} parent=1 // pred_region
      %39 = dma.done [#allocation6], 1024
    $region17: #{tpu_custom_call.1} parent=1 // pred_fallthru
      _
    %p41 = scmp.eq.s32.totalorder 0, 0
    // Predicated region
    $region18: #{tpu_custom_call.1} parent=1 // pred_check
      %p42 = pneg %p41
    $region19: #{tpu_custom_call.1} parent=1 // pred_check_branch
      %44 = sbr.rel (%p42) target = $region21
    $region20: #{tpu_custom_call.1} parent=1 // pred_region
      %45 = vst [vmem:[#allocation7] sm:$0xff] 0.0
      %46 = vst [vmem:[#allocation7 + $0x8] sm:$0xff] 0.0
    $region21: #{tpu_custom_call.1} parent=1 // pred_fallthru
      _
    %v47 = vld [vmem:[#allocation7] sm:$0xff]
    %v48 = vld [vmem:[#allocation7 + $0x8] sm:$0xff]
    %v49 = vld [vmem:[#allocation2] sm:$0xf]
    %v50 = vld [vmem:[#allocation2 + $0x4] sm:$0xf]
    %v51 = vld [vmem:[#allocation5] sm:$0xf]
    %v52 = vld [vmem:[#allocation5 + $0x4] sm:$0xf]
    %v53 = vld [vmem:[#allocation5 + $0x8] sm:$0xf]
    %v54 = vld [vmem:[#allocation5 + $0xc] sm:$0xf]
    %v55 = vld [vmem:[#allocation5 + $0x10] sm:$0xf]
    %v56 = vld [vmem:[#allocation5 + $0x14] sm:$0xf]
    %v57 = vld [vmem:[#allocation5 + $0x18] sm:$0xf]
    %v58 = vld [vmem:[#allocation5 + $0x1c] sm:$0xf]
    %v59 = vld [vmem:[#allocation5 + $0x20] sm:$0xf]
    %v60 = vld [vmem:[#allocation5 + $0x24] sm:$0xf]
    %v61 = vld [vmem:[#allocation5 + $0x28] sm:$0xf]
    %v62 = vld [vmem:[#allocation5 + $0x2c] sm:$0xf]
    %v63 = vld [vmem:[#allocation5 + $0x30] sm:$0xf]
    %v64 = vld [vmem:[#allocation5 + $0x34] sm:$0xf]
    %v65 = vld [vmem:[#allocation5 + $0x38] sm:$0xf]
    %v66 = vld [vmem:[#allocation5 + $0x3c] sm:$0xf]
    %v69 = vunpack.c.l.b16 %v49
    %v70 = vunpack.c.l.b16 %v50
    %v71 = vpack.c.b16 %v70, %v69
    %v89 = vunpack.c.l.b16 %v51
    %v90 = vunpack.c.l.b16 %v52
    %v91 = vunpack.c.l.b16 %v53
    %v92 = vunpack.c.l.b16 %v54
    %v93 = vunpack.c.l.b16 %v55
    %v94 = vunpack.c.l.b16 %v56
    %v95 = vunpack.c.l.b16 %v57
    %v96 = vunpack.c.l.b16 %v58
    %v97 = vunpack.c.l.b16 %v59
    %v98 = vunpack.c.l.b16 %v60
    %v99 = vunpack.c.l.b16 %v61
    %v100 = vunpack.c.l.b16 %v62
    %v101 = vunpack.c.l.b16 %v63
    %v102 = vunpack.c.l.b16 %v64
    %v103 = vunpack.c.l.b16 %v65
    %v104 = vunpack.c.l.b16 %v66
    %v105 = vpack.c.b16 %v90, %v89
    %v106 = vpack.c.b16 %v92, %v91
    %v107 = vpack.c.b16 %v94, %v93
    %v108 = vpack.c.b16 %v96, %v95
    %v109 = vpack.c.b16 %v98, %v97
    %v110 = vpack.c.b16 %v100, %v99
    %v111 = vpack.c.b16 %v102, %v101
    %v112 = vpack.c.b16 %v104, %v103
    %121 = vmatprep.subr.bf16.mxu0 0
    %122 = vmatpush1.bf16.msra.mxu0 %v105
    %123 = vmatprep.subr.bf16.mxu0 0
    %124 = vmatpush1.bf16.msra.mxu0 %v106
    %125 = vmatprep.subr.bf16.mxu0 0
    %126 = vmatpush1.bf16.msra.mxu0 %v107
    %127 = vmatprep.subr.bf16.mxu0 0
    %128 = vmatpush1.bf16.msra.mxu0 %v108
    %129 = vmatprep.subr.bf16.mxu0 0
    %130 = vmatpush1.bf16.msra.mxu0 %v109
    %131 = vmatprep.subr.bf16.mxu0 0
    %132 = vmatpush1.bf16.msra.mxu0 %v110
    %133 = vmatprep.subr.bf16.mxu0 0
    %134 = vmatpush1.bf16.msra.mxu0 %v111
    %135 = vmatprep.subr.bf16.mxu0 0
    %136 = vmatpush1.bf16.msra.mxu0 %v112
    %137 = vmatprep.subr.bf16.mxu0 0
    %138 = vmatpush1.bf16.msra.mxu0 0
    %139 = vmatprep.subr.bf16.mxu0 0
    %140 = vmatpush1.bf16.msra.mxu0 0
    %141 = vmatprep.subr.bf16.mxu0 0
    %142 = vmatpush1.bf16.msra.mxu0 0
    %143 = vmatprep.subr.bf16.mxu0 0
    %144 = vmatpush1.bf16.msra.mxu0 0
    %145 = vmatprep.subr.bf16.mxu0 0
    %146 = vmatpush1.bf16.msra.mxu0 0
    %147 = vmatprep.subr.bf16.mxu0 0
    %148 = vmatpush1.bf16.msra.mxu0 0
    %149 = vmatprep.subr.bf16.mxu0 0
    %150 = vmatpush1.bf16.msra.mxu0 0
    %151 = vmatprep.subr.bf16.mxu0 0
    %152 = vmatpush1.bf16.msra.mxu0 0
    %153 = vmatprep.mubr.bf16.mxu0 0
    %154 = vmatmul.mubr.bf16.gmra.mrb[0].mxu0 %v71
    %v155 = vpop.f32.mrb[0].mxu0
    %v156 = vadd.f32 0.0, %v155
    %v157 = vpop.f32.mrb[0].mxu0
    %v158 = vpop.f32.mrb[0].mxu0
    %v159 = vadd.f32 0.0, %v158
    %v160 = vpop.f32.mrb[0].mxu0
    %161 = vdwg.mxu0
    %v162 = vadd.f32 %v47, %v156
    %v163 = vadd.f32 %v48, %v159
    %164 = vst [vmem:[#allocation7] sm:$0xff] %v162
    %165 = vst [vmem:[#allocation7 + $0x8] sm:$0xff] %v163
    // Predicated region
    $region22: #{tpu_custom_call.1} parent=1 // pred_check
      %p166 = pneg %p41
    $region23: #{tpu_custom_call.1} parent=1 // pred_check_branch
      %168 = sbr.rel (%p166) target = $region25
    $region24: #{tpu_custom_call.1} parent=1 // pred_region
      %v169 = vld [vmem:[#allocation7] sm:$0xff]
      %v170 = vld [vmem:[#allocation7 + $0x8] sm:$0xff]
      %v171 = vmax.f32 %v169, 0.0
      %v172 = vmax.f32 %v170, 0.0
      %173 = vst [vmem:[#allocation7] sm:$0xff] %v171
      %174 = vst [vmem:[#allocation7 + $0x8] sm:$0xff] %v172
    $region25: #{tpu_custom_call.1} parent=1 // pred_fallthru
      _
    // Predicated region
    $region26: #{tpu_custom_call.1} parent=1 // pred_check
      _
    $region27: #{tpu_custom_call.1} parent=1 // pred_check_branch
      %176 = sbr.rel (0) target = $region29
    $region28: #{tpu_custom_call.1} parent=1 // pred_region
      %s178 = ssub.s32 256, 256
      %179 = vsyncadd [#allocation4], %s178
      %s180 = sshll.u32 [#allocation7], 4
      %s181 = int_to_ptr.vmem [resolvable:$true] %s180
      %186 = dma.vmem_to_hbm [thread:$0]  %s181, 256, %s2, [#allocation4], 128, 128, 8
    $region29: #{tpu_custom_call.1} parent=1 // pred_fallthru
      _
    // Predicated region
    $region30: #{tpu_custom_call.1} parent=1 // pred_check
      _
    $region31: #{tpu_custom_call.1} parent=1 // pred_check_branch
      %188 = sbr.rel (0) target = $region33
    $region32: #{tpu_custom_call.1} parent=1 // pred_region
      %189 = dma.done [#allocation4], 256
    $region33: #{tpu_custom_call.1} parent=1 // pred_fallthru
      _
    %190 = vsyncpa [#allocation3], 1
    %191 = vsyncpa [#allocation6], 1
    %192 = vsyncpa [#allocation4], 1

</llo_original>
